<compile_context>
chip_gen: v7x
topology: tpu7x:2x2x1
jax: 0.10.0
libtpu: 0.0.40
codegen_flags: <defaults>
</compile_context>

<pallas_src>
import jax
import jax.numpy as jnp
from jax import lax
from jax.experimental import pallas as pl
from jax.experimental.pallas import tpu as pltpu

# ---------------- PillarLayer config (synthetic, small) ----------------
VOXEL_SIZE = (0.5, 0.5, 4.0)                    # (vx, vy, vz)
PC_RANGE = (0.0, 0.0, -2.0, 8.0, 8.0, 2.0)      # (xmin, ymin, zmin, xmax, ymax, zmax)
MAX_POINTS = 8                                  # max_num_points per pillar
MAX_VOXELS = 32                                 # max pillars per sample
C = 4                                           # point feature dim (x, y, z, r)
N = 256                                         # points per sample
ROWS = MAX_VOXELS * MAX_POINTS                  # flattened pillar slot count (256)

GX = int(round((PC_RANGE[3] - PC_RANGE[0]) / VOXEL_SIZE[0]))   # 16
GY = int(round((PC_RANGE[4] - PC_RANGE[1]) / VOXEL_SIZE[1]))   # 16
GZ = int(round((PC_RANGE[5] - PC_RANGE[2]) / VOXEL_SIZE[2]))   # 1
NUM_CELLS = GX * GY * GZ

TK = 128                                        # K-tile along the point axis
NK = N // TK


# ---------------- Pallas kernel: one-hot-matmul gather into pillar slots -------
# Lane-dense layout on every ref:
#   idx_ref: (1, ROWS) i32   slot r gathers point idx[r]; idx == N (sentinel) -> zeros
#   pts_ref: (C, N)    f32   points, feature-major
#   out_ref: (C, ROWS) f32   gathered pillar slots, feature-major (transposed back
#                            to (ROWS, C) by the wrapper)
def _gather_kernel(idx_ref, pts_ref, out_ref):
    idx = idx_ref[...]                                             # (1, ROWS)

    def body(k, acc):
        start = pl.multiple_of(k * TK, TK)
        # one-hot^T chunk: oh[n, r] = (idx[r] == start + n), shape (TK, ROWS).
        # idx is (1, ROWS): the compare is a sublane broadcast, not a lane broadcast.
        row = lax.broadcasted_iota(jnp.int32, (TK, ROWS), 0) + start
        oh = (idx == row).astype(jnp.float32)
        # (C, TK) @ (TK, ROWS) -> (C, ROWS), f32 accumulate on the MXU.
        return acc + jnp.dot(pts_ref[:, pl.ds(start, TK)], oh,
                             preferred_element_type=jnp.float32)

    acc0 = jnp.zeros((C, ROWS), jnp.float32)
    out_ref[...] = lax.fori_loop(0, NK, body, acc0, unroll=True)   # single slab store


# ---------------- Per-sample hard voxelization bookkeeping (plain JAX glue) ----
def _voxelize_glue(pts):
    # pts: (N, C) f32 for one sample.
    # Voxel-id math lives here (not in a Pallas kernel) so XLA fuses the
    # floor/compare directly into the scatter-min below — no custom-call boundary.
    n = pts.shape[0]
    cx = jnp.floor((pts[:, 0] - PC_RANGE[0]) / VOXEL_SIZE[0]).astype(jnp.int32)
    cy = jnp.floor((pts[:, 1] - PC_RANGE[1]) / VOXEL_SIZE[1]).astype(jnp.int32)
    cz = jnp.floor((pts[:, 2] - PC_RANGE[2]) / VOXEL_SIZE[2]).astype(jnp.int32)
    valid = ((cx >= 0) & (cx < GX) & (cy >= 0) & (cy < GY)
             & (cz >= 0) & (cz < GZ))
    flat_id = jnp.where(valid, cz * (GY * GX) + cy * GX + cx, NUM_CELLS)  # sentinel

    pidx = jnp.arange(n, dtype=jnp.int32)

    # first-occurrence point index per cell -> pillar ordering (first-come order)
    first_occ = jnp.full((NUM_CELLS + 1,), n, jnp.int32).at[flat_id].min(pidx)
    first_occ = first_occ.at[NUM_CELLS].set(n)                # sentinel cell never a pillar
    num_occ = jnp.sum((first_occ[:NUM_CELLS] < n).astype(jnp.int32))
    n_pillars = jnp.minimum(num_occ, MAX_VOXELS)
    cell_order = jnp.argsort(first_occ, stable=True).astype(jnp.int32)

    ranks = jnp.arange(NUM_CELLS + 1, dtype=jnp.int32)
    pillar_assign = jnp.where(ranks < n_pillars, ranks, -1)
    pillar_of_cell = jnp.full((NUM_CELLS + 1,), -1, jnp.int32).at[cell_order].set(pillar_assign)

    # within-cell slot (first-come order) via stable sort
    # TODO(synk): dedup/sort bookkeeping has no clean Pallas equivalent; kept in plain JAX.
    order = jnp.argsort(flat_id, stable=True).astype(jnp.int32)
    sorted_id = flat_id[order]
    pos = jnp.arange(n, dtype=jnp.int32)
    is_new = jnp.concatenate([jnp.ones((1,), bool), sorted_id[1:] != sorted_id[:-1]])
    run_start = lax.associative_scan(jnp.maximum, jnp.where(is_new, pos, 0))
    slot = pos - run_start

    pillar = pillar_of_cell[sorted_id]
    ok = (pillar >= 0) & (slot < MAX_POINTS)
    tgt = jnp.where(ok, pillar * MAX_POINTS + slot, ROWS)
    gather_flat = jnp.full((ROWS + 1,), n, jnp.int32).at[tgt].set(order)
    gather_idx = gather_flat[:ROWS]                           # index n -> zero (sentinel)

    cell_count = jnp.zeros((NUM_CELLS + 1,), jnp.int32).at[flat_id].add(1)
    cells_for_pillars = cell_order[:MAX_VOXELS]
    valid_pillar = jnp.arange(MAX_VOXELS) < n_pillars
    npoints = jnp.where(valid_pillar,
                        jnp.minimum(cell_count[cells_for_pillars], MAX_POINTS), 0)

    vz = cells_for_pillars // (GY * GX)
    rem = cells_for_pillars % (GY * GX)
    vy = rem // GX
    vx = rem % GX
    coors = jnp.stack([vz, vy, vx], axis=-1).astype(jnp.int32)  # (z, y, x) order
    coors = jnp.where(valid_pillar[:, None], coors, -1)
    return gather_idx, coors, npoints


# ---------------- Single jitted forward over the whole batch -------------------
@jax.jit
def _forward_core(stacked_pts):
    # stacked_pts: (bs, N, C) f32
    bs = stacked_pts.shape[0]

    # Voxel ids + hard-voxelization bookkeeping (fused by XLA), vmapped over batch.
    gather_idx, coors, npoints = jax.vmap(_voxelize_glue)(stacked_pts)

    # Pallas gather: one grid step per sample, everything lane-dense.
    pts_t = jnp.transpose(stacked_pts, (0, 2, 1))             # (bs, C, N)
    idx_row = gather_idx.reshape(bs, 1, ROWS).astype(jnp.int32)

    out_t = pl.pallas_call(
        _gather_kernel,
        out_shape=jax.ShapeDtypeStruct((bs, C, ROWS), jnp.float32),
        grid=(bs,),
        in_specs=[pl.BlockSpec((None, 1, ROWS), lambda b: (b, 0, 0)),
                  pl.BlockSpec((None, C, N), lambda b: (b, 0, 0))],
        out_specs=pl.BlockSpec((None, C, ROWS), lambda b: (b, 0, 0)),
        compiler_params=pltpu.CompilerParams(dimension_semantics=("parallel",)),
    )(idx_row, pts_t)

    # Undo the transpose in the wrapper (cheap; result is reshaped anyway).
    pillars = jnp.transpose(out_t, (0, 2, 1)).reshape(bs, MAX_VOXELS, MAX_POINTS, C)

    # Prepend batch index column (F.pad(coors, (1, 0), value=i)) and flatten batch.
    batch_col = jnp.broadcast_to(
        jnp.arange(bs, dtype=jnp.int32)[:, None, None], (bs, MAX_VOXELS, 1))
    coors_b = jnp.concatenate([batch_col, coors], axis=-1)

    return (pillars.reshape(bs * MAX_VOXELS, MAX_POINTS, C),
            coors_b.reshape(bs * MAX_VOXELS, 4),
            npoints.reshape(bs * MAX_VOXELS))


# ---------------- PillarLayer.forward ------------------------------------------
def pillar_layer_forward(batched_pts):
    # TODO(synk): PyTorch returns exactly P_i pillars per sample; JAX static shapes
    # force padding each sample to MAX_VOXELS (pad rows: pillars=0, coors=-1, npoints=0).
    stacked = jnp.stack([p.astype(jnp.float32) for p in batched_pts], axis=0)  # (bs, N, C)
    return _forward_core(stacked)


if __name__ == "__main__":
    key = jax.random.PRNGKey(0)
    bs = 2
    batched_pts = []
    for _ in range(bs):
        key, k1, k2 = jax.random.split(key, 3)
        xyz = jax.random.uniform(
            k1, (N, 3),
            minval=jnp.array([-0.5, -0.5, -2.5]),
            maxval=jnp.array([8.5, 8.5, 2.5]))                  # some points out of range
        inten = jax.random.uniform(k2, (N, 1))
        batched_pts.append(jnp.concatenate([xyz, inten], axis=1).astype(jnp.float32))

    pillars, coors_batch, npoints = pillar_layer_forward(batched_pts)
    jax.block_until_ready((pillars, coors_batch, npoints))

    assert pillars.shape == (bs * MAX_VOXELS, MAX_POINTS, C)
    assert coors_batch.shape == (bs * MAX_VOXELS, 4)
    assert npoints.shape == (bs * MAX_VOXELS,)
    # light sanity checks
    assert int(npoints.max()) <= MAX_POINTS
    assert int(coors_batch[:, 0].min()) >= 0 and int(coors_batch[:, 0].max()) < bs
    # padded (invalid) pillar rows must be all-zero
    assert float(jnp.abs(jnp.where((npoints == 0)[:, None, None], pillars, 0.0)).max()) == 0.0
    print("KERNEL_OK")
</pallas_src>

<mosaic_0001>
module attributes {stable_mosaic.version = 11 : i64} {
  func.func private @main(%arg0: i32) attributes {dimension_semantics = [#tpu.dimension_semantics<core_parallel>], iteration_bounds = array<i64: 2>, tpu.core_type = #tpu.core_type<sc_scalar_subcore>, window_params = []} {
    return
  }
}

module attributes {stable_mosaic.version = 11 : i64} {
  func.func private @main(%arg0: i32) attributes {dimension_semantics = [#tpu.dimension_semantics<core_parallel>], iteration_bounds = array<i64: 2>, tpu.core_type = #tpu.core_type<sc_scalar_subcore>, window_params = []} {
    return
  }
}

module attributes {stable_mosaic.version = 11 : i64} {
  func.func @_gather_kernel(%arg0: i32, %arg1: memref<1x1x256xi32, #tpu.memory_space<vmem>>, %arg2: memref<1x4x256xf32, #tpu.memory_space<vmem>>, %arg3: memref<1x4x256xf32, #tpu.memory_space<vmem>>) attributes {dimension_semantics = [#tpu.dimension_semantics<parallel>], iteration_bounds = array<i64: 2>, scalar_prefetch = 0 : i64, scratch_operands = 0 : i64, tpu.core_type = #tpu.core_type<tc>, window_params = [{transform_indices = @transform_0, window_bounds = array<i64: 1, 1, 256>}, {transform_indices = @transform_1, window_bounds = array<i64: 1, 4, 256>}, {transform_indices = @transform_2, window_bounds = array<i64: 1, 4, 256>}]} {
    %c0 = arith.constant 0 : index
    %c0_0 = arith.constant 0 : index
    %c0_1 = arith.constant 0 : index
    %0 = vector.load %arg1[%c0, %c0_0, %c0_1] : memref<1x1x256xi32, #tpu.memory_space<vmem>>, vector<1x1x256xi32>
    %1 = vector.shape_cast %0 : vector<1x1x256xi32> to vector<1x256xi32>
    %cst = arith.constant 0.000000e+00 : f32
    %2 = vector.broadcast %cst : f32 to vector<4x256xf32>
    %c0_i32 = arith.constant 0 : i32
    %c128_i32 = arith.constant 128 : i32
    %3 = arith.muli %c0_i32, %c128_i32 : i32
    %4 = tpu.assume_multiple %3, 128 : i32
    %5 = tpu.iota {dimensions = array<i32: 0>} : vector<128x256xi32>
    %6 = vector.broadcast %4 : i32 to vector<128x256xi32>
    %7 = arith.addi %5, %6 : vector<128x256xi32>
    %8 = vector.broadcast %1 : vector<1x256xi32> to vector<128x256xi32>
    %9 = arith.cmpi eq, %8, %7 : vector<128x256xi32>
    %10 = arith.extui %9 : vector<128x256xi1> to vector<128x256xi32>
    %11 = arith.sitofp %10 : vector<128x256xi32> to vector<128x256xf32>
    %c0_2 = arith.constant 0 : index
    %c0_3 = arith.constant 0 : index
    %12 = arith.index_cast %4 : i32 to index
    %13 = vector.load %arg2[%c0_2, %c0_3, %12] : memref<1x4x256xf32, #tpu.memory_space<vmem>>, vector<1x4x128xf32>
    %14 = vector.shape_cast %13 : vector<1x4x128xf32> to vector<4x128xf32>
    %cst_4 = arith.constant dense<0.000000e+00> : vector<4x256xf32>
    %15 = tpu.matmul %14, %11, %cst_4 {dimension_numbers = #tpu.dot_dimension_numbers<[1], [0], [0], [1], [0, 0, 1, 1], [], []>} : vector<4x128xf32>, vector<128x256xf32>, vector<4x256xf32> -> vector<4x256xf32>
    %16 = arith.addf %2, %15 : vector<4x256xf32>
    %c1_i32 = arith.constant 1 : i32
    %c128_i32_5 = arith.constant 128 : i32
    %17 = arith.muli %c1_i32, %c128_i32_5 : i32
    %18 = tpu.assume_multiple %17, 128 : i32
    %19 = tpu.iota {dimensions = array<i32: 0>} : vector<128x256xi32>
    %20 = vector.broadcast %18 : i32 to vector<128x256xi32>
    %21 = arith.addi %19, %20 : vector<128x256xi32>
    %22 = vector.broadcast %1 : vector<1x256xi32> to vector<128x256xi32>
    %23 = arith.cmpi eq, %22, %21 : vector<128x256xi32>
    %24 = arith.extui %23 : vector<128x256xi1> to vector<128x256xi32>
    %25 = arith.sitofp %24 : vector<128x256xi32> to vector<128x256xf32>
    %c0_6 = arith.constant 0 : index
    %c0_7 = arith.constant 0 : index
    %26 = arith.index_cast %18 : i32 to index
    %27 = vector.load %arg2[%c0_6, %c0_7, %26] : memref<1x4x256xf32, #tpu.memory_space<vmem>>, vector<1x4x128xf32>
    %28 = vector.shape_cast %27 : vector<1x4x128xf32> to vector<4x128xf32>
    %cst_8 = arith.constant dense<0.000000e+00> : vector<4x256xf32>
    %29 = tpu.matmul %28, %25, %cst_8 {dimension_numbers = #tpu.dot_dimension_numbers<[1], [0], [0], [1], [0, 0, 1, 1], [], []>} : vector<4x128xf32>, vector<128x256xf32>, vector<4x256xf32> -> vector<4x256xf32>
    %30 = arith.addf %16, %29 : vector<4x256xf32>
    %c2_i32 = arith.constant 2 : i32
    %c0_9 = arith.constant 0 : index
    %c0_10 = arith.constant 0 : index
    %c0_11 = arith.constant 0 : index
    %31 = vector.load %arg3[%c0_9, %c0_10, %c0_11] : memref<1x4x256xf32, #tpu.memory_space<vmem>>, vector<1x4x256xf32>
    %32 = vector.shape_cast %31 : vector<1x4x256xf32> to vector<4x256xf32>
    %33 = vector.shape_cast %30 : vector<4x256xf32> to vector<1x4x256xf32>
    tpu.vector_store %arg3[%c0_9, %c0_10, %c0_11], %33 {strides = array<i32>} : memref<1x4x256xf32, #tpu.memory_space<vmem>>, vector<1x4x256xf32>,
    return
  }
  func.func @transform_0(%arg0: i32) -> (i32, i32, i32) {
    %c0_i32 = arith.constant 0 : i32
    %c0_i32_0 = arith.constant 0 : i32
    %c0_i32_1 = arith.constant 0 : i32
    return %arg0, %c0_i32, %c0_i32_0 : i32, i32, i32
  }
  func.func @transform_1(%arg0: i32) -> (i32, i32, i32) {
    %c0_i32 = arith.constant 0 : i32
    %c0_i32_0 = arith.constant 0 : i32
    %c0_i32_1 = arith.constant 0 : i32
    return %arg0, %c0_i32, %c0_i32_0 : i32, i32, i32
  }
  func.func @transform_2(%arg0: i32) -> (i32, i32, i32) {
    %c0_i32 = arith.constant 0 : i32
    %c0_i32_0 = arith.constant 0 : i32
    %c0_i32_1 = arith.constant 0 : i32
    return %arg0, %c0_i32, %c0_i32_0 : i32, i32, i32
  }
}

</mosaic_0001>

<llo_original>
// kernel: _forward_core.1
$region0: #{_forward_core.1}
  #allocation0 [shape = 'u32[]', space=smem, size = 0x4, offset = 0x4, fixed_abs, tag = 'smem constant byte address 0x4 - core index']
  #allocation1 [shape = 'u32[144,128]{1,0:T(1,128)}', space=vmem, size = 0x12000, scoped, tag = 'internal scratch']
  %s0 = inlined_call_operand.vmem [shape: s32[2,1,256], index: 0, kind: input, shape index: {}]
  %s1 = inlined_call_operand.vmem [shape: f32[2,4,256], index: 1, kind: input, shape index: {}]
  %s2 = inlined_call_operand.vmem [shape: f32[2,4,256], index: 2, kind: output, shape index: {}]
  %s3 = sld [smem:[#allocation0]]
  $region41: #{_forward_core.1} parent=0
    _
  %s5 = ssub.s32 1, %s3
  %s6 = scalar_select 0, %s5, %s3
  loop: start=0, step=1, limit=4
  $region2: #{_forward_core.1} parent=0 // loop_pre_header
    _
  $region3: #{_forward_core.1} parent=0 // loop_header
    %s8 = sphi 0, %s12
    %p9 = scmp.ge.s32.totalorder %s8, 4
    %s18 = sphi 0, %s20
    %s21 = sphi 0, %s18
    %s22 = sphi 0, %s21
    %s38 = sphi 0, %s22
    %s44 = sphi 0, %s46
    %s47 = sphi 0, %s44
    %s48 = sphi 0, %s47
    %s64 = sphi 0, %s48
    %s70 = sphi 0, %s72
    %s73 = sphi 0, %s70
    %s74 = sphi 0, %s73
    %s90 = sphi 0, %s74
  $region4: #{_forward_core.1} parent=0 // loop_header_branch
    %11 = sbr.rel (%p9) target = $region8
  $region5: #{_forward_core.1} parent=0 // loop_body
    %s13 = ssub.s32 %s8, 1
    %s14 = ssub.s32 %s8, 2
    %s15 = sadd.s32 %s8, 1
    %s16 = ssub.s32 %s8, %s15
    %p17 = scmp.eq.s32.totalorder %s16, 0
    %s19 = sadd.s32 %s18, 1
    %s20 = scalar_select %p17, %s18, %s19
    %p23 = pneg %p17
    %p24 = scmp.eq.s32.totalorder %s8, 1
    %p25 = por %p23, %p24
    %p26 = scmp.ne.s32.totalorder %s18, %s21
    %p27 = scmp.eq.s32.totalorder %s8, 0
    %p28 = por %p26, %p27
    %p29 = scmp.ne.s32.totalorder %s18, %s21
    %p30 = scmp.eq.s32.totalorder %s13, 1
    %p31 = por %p29, %p30
    %p32 = scmp.ne.s32.totalorder %s21, %s22
    %p33 = scmp.eq.s32.totalorder %s13, 0
    %p34 = por %p32, %p33
    %p35 = scmp.ne.s32.totalorder %s21, %s22
    %p36 = scmp.eq.s32.totalorder %s14, 1
    %p37 = por %p35, %p36
    %p39 = scmp.ne.s32.totalorder %s22, %s38
    %p40 = scmp.eq.s32.totalorder %s14, 0
    %p41 = por %p39, %p40
    %s42 = ssub.s32 %s8, %s15
    %p43 = scmp.eq.s32.totalorder %s42, 0
    %s45 = sadd.s32 %s44, 1
    %s46 = scalar_select %p43, %s44, %s45
    %p49 = pneg %p43
    %p50 = scmp.eq.s32.totalorder %s8, 1
    %p51 = por %p49, %p50
    %p52 = scmp.ne.s32.totalorder %s44, %s47
    %p53 = scmp.eq.s32.totalorder %s8, 0
    %p54 = por %p52, %p53
    %p55 = scmp.ne.s32.totalorder %s44, %s47
    %p56 = scmp.eq.s32.totalorder %s13, 1
    %p57 = por %p55, %p56
    %p58 = scmp.ne.s32.totalorder %s47, %s48
    %p59 = scmp.eq.s32.totalorder %s13, 0
    %p60 = por %p58, %p59
    %p61 = scmp.ne.s32.totalorder %s47, %s48
    %p62 = scmp.eq.s32.totalorder %s14, 1
    %p63 = por %p61, %p62
    %p65 = scmp.ne.s32.totalorder %s48, %s64
    %p66 = scmp.eq.s32.totalorder %s14, 0
    %p67 = por %p65, %p66
    %s68 = ssub.s32 %s8, %s15
    %p69 = scmp.eq.s32.totalorder %s68, 0
    %s71 = sadd.s32 %s70, 1
    %s72 = scalar_select %p69, %s70, %s71
    %p75 = pneg %p69
    %p76 = scmp.eq.s32.totalorder %s8, 1
    %p77 = por %p75, %p76
    %p78 = scmp.ne.s32.totalorder %s70, %s73
    %p79 = scmp.eq.s32.totalorder %s8, 0
    %p80 = por %p78, %p79
    %p81 = scmp.ne.s32.totalorder %s70, %s73
    %p82 = scmp.eq.s32.totalorder %s13, 1
    %p83 = por %p81, %p82
    %p84 = scmp.ne.s32.totalorder %s73, %s74
    %p85 = scmp.eq.s32.totalorder %s13, 0
    %p86 = por %p84, %p85
    %p87 = scmp.ne.s32.totalorder %s73, %s74
    %p88 = scmp.eq.s32.totalorder %s14, 1
    %p89 = por %p87, %p88
    %p91 = scmp.ne.s32.totalorder %s74, %s90
    %p92 = scmp.eq.s32.totalorder %s14, 0
    %p93 = por %p91, %p92
    %p94 = scmp.le.s32.totalorder 1, %s8
    %p95 = scmp.lt.s32.totalorder %s8, 3
    %p96 = pnand %p94, %p95
    %p97 = pneg %p96
    // Predicated region
    $region9: #{_forward_core.1} parent=5 // pred_check
      _
    $region10: #{_forward_core.1} parent=5 // pred_check_branch
      %99 = sbr.rel (%p96) target = $region12
    $region11: #{_forward_core.1} parent=5 // pred_region
      %s100 = ssub.s32 %s8, 1
    $region12: #{_forward_core.1} parent=5 // pred_fallthru
      _
    %p101 = scmp.lt.s32.totalorder %s8, 2
    // Predicated region
    $region13: #{_forward_core.1} parent=5 // pred_check
      %p102 = pneg %p101
    $region14: #{_forward_core.1} parent=5 // pred_check_branch
      %104 = sbr.rel (%p102) target = $region16
    $region15: #{_forward_core.1} parent=5 // pred_region
      // Predicated region
      $region17: #{_forward_core.1} parent=15 // pred_check
        %p105 = pneg %p28
      $region18: #{_forward_core.1} parent=15 // pred_check_branch
        %107 = sbr.rel (%p105) target = $region20
      $region19: #{_forward_core.1} parent=15 // pred_region
        %p108 = scmp.lt.s32.totalorder %s8, 1
        %s109 = scalar_select %p108, %s8, 1
        %s110 = smul.addr %s109, 2
        %s111 = scalar_lea.vmem %s0, %s110
      $region20: #{_forward_core.1} parent=15 // pred_fallthru
        _
      // Predicated region
      $region21: #{_forward_core.1} parent=15 // pred_check
        %p112 = pneg %p54
      $region22: #{_forward_core.1} parent=15 // pred_check_branch
        %114 = sbr.rel (%p112) target = $region24
      $region23: #{_forward_core.1} parent=15 // pred_region
        %p115 = scmp.lt.s32.totalorder %s8, 1
        %s116 = scalar_select %p115, %s8, 1
        %s117 = smul.addr %s116, 2
        %s118 = smul.addr %s117, 4
        %s119 = scalar_lea.vmem %s1, %s118
      $region24: #{_forward_core.1} parent=15 // pred_fallthru
        _
    $region16: #{_forward_core.1} parent=5 // pred_fallthru
      _
    %p120 = scmp.le.s32.totalorder 1, %s8
    %p121 = scmp.lt.s32.totalorder %s8, 3
    %p122 = pnand %p120, %p121
    %p123 = pneg %p122
    // Predicated region
    $region25: #{_forward_core.1} parent=5 // pred_check
      _
    $region26: #{_forward_core.1} parent=5 // pred_check_branch
      %125 = sbr.rel (%p122) target = $region28
    $region27: #{_forward_core.1} parent=5 // pred_region
      %s126 = ssub.s32 %s8, 1
      %p127 = scmp.lt.s32.totalorder %s13, 1
      %s128 = scalar_select %p127, %s13, 1
      %s129 = smul.addr %s128, 2
      %s130 = scalar_lea.vmem %s0, %s129
      %p131 = pneg %p34
      %p132 = pneg %p31
      %p133 = scmp.lt.s32.totalorder %s13, 1
      %s134 = scalar_select %p133, %s13, 1
      %s135 = smul.addr %s134, 2
      %s136 = smul.addr %s135, 4
      %s137 = scalar_lea.vmem %s1, %s136
      %p138 = pneg %p60
      %p139 = pneg %p57
      %p140 = pneg %p86
      %p141 = pneg %p83
      %p142 = scmp.lt.s32.totalorder %s13, 1
      %s143 = scalar_select %p142, %s13, 1
      %s144 = smul.addr %s143, 2
      %s145 = smul.addr %s144, 4
      %s146 = scalar_lea.vmem %s2, %s145
      %p147 = scmp.lt.s32.totalorder %s13, 1
      %s148 = scalar_select %p147, %s13, 1
      %s149 = smul.addr %s148, 2
      %s150 = scalar_lea.vmem %s0, %s149
      %p151 = scmp.lt.s32.totalorder %s13, 1
      %s152 = scalar_select %p151, %s13, 1
      %s153 = smul.addr %s152, 2
      %s154 = smul.addr %s153, 4
      %s155 = scalar_lea.vmem %s1, %s154
      %p156 = scmp.lt.s32.totalorder %s13, 1
      %s157 = scalar_select %p156, %s13, 1
      %s158 = smul.addr %s157, 2
      %s159 = smul.addr %s158, 4
      %s160 = scalar_lea.vmem %s2, %s159
      %v161 = vld [vmem:[%s150] sm:$0x3]
      %v162 = vlaneseq
      %v163 = vshrl.u32 %v162, 7
      %v164 = vadd.s32 %v163, 8
      %v165 = vadd.s32 %v163, 16
      %v166 = vadd.s32 %v163, 24
      %v167 = vadd.s32 %v163, 32
      %v168 = vadd.s32 %v163, 40
      %v169 = vadd.s32 %v163, 48
      %v170 = vadd.s32 %v163, 56
      %v171 = vadd.s32 %v163, 64
      %v172 = vadd.s32 %v163, 72
      %v173 = vadd.s32 %v163, 80
      %v174 = vadd.s32 %v163, 88
      %v175 = vadd.s32 %v163, 96
      %v176 = vadd.s32 %v163, 104
      %v177 = vadd.s32 %v163, 112
      %v178 = vadd.s32 %v163, 120
      %v179 = vstv 0
      %v180 = vadd.s32 %v163, %v179
      %v181 = vadd.s32 %v164, %v179
      %v182 = vadd.s32 %v165, %v179
      %v183 = vadd.s32 %v166, %v179
      %v184 = vadd.s32 %v167, %v179
      %v185 = vadd.s32 %v168, %v179
      %v186 = vadd.s32 %v169, %v179
      %v187 = vadd.s32 %v170, %v179
      %v188 = vadd.s32 %v171, %v179
      %v189 = vadd.s32 %v172, %v179
      %v190 = vadd.s32 %v173, %v179
      %v191 = vadd.s32 %v174, %v179
      %v192 = vadd.s32 %v175, %v179
      %v193 = vadd.s32 %v176, %v179
      %v194 = vadd.s32 %v177, %v179
      %v195 = vadd.s32 %v178, %v179
      %v196 = vlaneseq
      %v197 = vshrl.u32 %v196, 7
      %v198 = vsub.s32 0, %v197
      %v199 = vrot.slane %v161, %v198
      %v200 = vlaneseq
      %v201 = vshrl.u32 %v200, 7
      %v202 = vsub.s32 1, %v201
      %v203 = vrot.slane %v161, %v202
      %vm204 = vcmp.eq.s32.totalorder %v199, %v180
      %vm205 = vcmp.eq.s32.totalorder %v203, %v180
      %vm206 = vcmp.eq.s32.totalorder %v199, %v181
      %vm207 = vcmp.eq.s32.totalorder %v203, %v181
      %vm208 = vcmp.eq.s32.totalorder %v199, %v182
      %vm209 = vcmp.eq.s32.totalorder %v203, %v182
      %vm210 = vcmp.eq.s32.totalorder %v199, %v183
      %vm211 = vcmp.eq.s32.totalorder %v203, %v183
      %vm212 = vcmp.eq.s32.totalorder %v199, %v184
      %vm213 = vcmp.eq.s32.totalorder %v203, %v184
      %vm214 = vcmp.eq.s32.totalorder %v199, %v185
      %vm215 = vcmp.eq.s32.totalorder %v203, %v185
      %vm216 = vcmp.eq.s32.totalorder %v199, %v186
      %vm217 = vcmp.eq.s32.totalorder %v203, %v186
      %vm218 = vcmp.eq.s32.totalorder %v199, %v187
      %vm219 = vcmp.eq.s32.totalorder %v203, %v187
      %vm220 = vcmp.eq.s32.totalorder %v199, %v188
      %vm221 = vcmp.eq.s32.totalorder %v203, %v188
      %vm222 = vcmp.eq.s32.totalorder %v199, %v189
      %vm223 = vcmp.eq.s32.totalorder %v203, %v189
      %vm224 = vcmp.eq.s32.totalorder %v199, %v190
      %vm225 = vcmp.eq.s32.totalorder %v203, %v190
      %vm226 = vcmp.eq.s32.totalorder %v199, %v191
      %vm227 = vcmp.eq.s32.totalorder %v203, %v191
      %vm228 = vcmp.eq.s32.totalorder %v199, %v192
      %vm229 = vcmp.eq.s32.totalorder %v203, %v192
      %vm230 = vcmp.eq.s32.totalorder %v199, %v193
      %vm231 = vcmp.eq.s32.totalorder %v203, %v193
      %vm232 = vcmp.eq.s32.totalorder %v199, %v194
      %vm233 = vcmp.eq.s32.totalorder %v203, %v194
      %vm234 = vcmp.eq.s32.totalorder %v199, %v195
      %vm235 = vcmp.eq.s32.totalorder %v203, %v195
      %v236 = vsel %vm204, 1, 0
      %v237 = vsel %vm205, 1, 0
      %v238 = vsel %vm206, 1, 0
      %v239 = vsel %vm207, 1, 0
      %v240 = vsel %vm208, 1, 0
      %v241 = vsel %vm209, 1, 0
      %v242 = vsel %vm210, 1, 0
      %v243 = vsel %vm211, 1, 0
      %v244 = vsel %vm212, 1, 0
      %v245 = vsel %vm213, 1, 0
      %v246 = vsel %vm214, 1, 0
      %v247 = vsel %vm215, 1, 0
      %v248 = vsel %vm216, 1, 0
      %v249 = vsel %vm217, 1, 0
      %v250 = vsel %vm218, 1, 0
      %v251 = vsel %vm219, 1, 0
      %v252 = vsel %vm220, 1, 0
      %v253 = vsel %vm221, 1, 0
      %v254 = vsel %vm222, 1, 0
      %v255 = vsel %vm223, 1, 0
      %v256 = vsel %vm224, 1, 0
      %v257 = vsel %vm225, 1, 0
      %v258 = vsel %vm226, 1, 0
      %v259 = vsel %vm227, 1, 0
      %v260 = vsel %vm228, 1, 0
      %v261 = vsel %vm229, 1, 0
      %v262 = vsel %vm230, 1, 0
      %v263 = vsel %vm231, 1, 0
      %v264 = vsel %vm232, 1, 0
      %v265 = vsel %vm233, 1, 0
      %v266 = vsel %vm234, 1, 0
      %v267 = vsel %vm235, 1, 0
      %v268 = vcvt.s32.f32 %v236
      %v269 = vcvt.s32.f32 %v237
      %v270 = vcvt.s32.f32 %v238
      %v271 = vcvt.s32.f32 %v239
      %v272 = vcvt.s32.f32 %v240
      %v273 = vcvt.s32.f32 %v241
      %v274 = vcvt.s32.f32 %v242
      %v275 = vcvt.s32.f32 %v243
      %v276 = vcvt.s32.f32 %v244
      %v277 = vcvt.s32.f32 %v245
      %v278 = vcvt.s32.f32 %v246
      %v279 = vcvt.s32.f32 %v247
      %v280 = vcvt.s32.f32 %v248
      %v281 = vcvt.s32.f32 %v249
      %v282 = vcvt.s32.f32 %v250
      %v283 = vcvt.s32.f32 %v251
      %v284 = vcvt.s32.f32 %v252
      %v285 = vcvt.s32.f32 %v253
      %v286 = vcvt.s32.f32 %v254
      %v287 = vcvt.s32.f32 %v255
      %v288 = vcvt.s32.f32 %v256
      %v289 = vcvt.s32.f32 %v257
      %v290 = vcvt.s32.f32 %v258
      %v291 = vcvt.s32.f32 %v259
      %v292 = vcvt.s32.f32 %v260
      %v293 = vcvt.s32.f32 %v261
      %v294 = vcvt.s32.f32 %v262
      %v295 = vcvt.s32.f32 %v263
      %v296 = vcvt.s32.f32 %v264
      %v297 = vcvt.s32.f32 %v265
      %v298 = vcvt.s32.f32 %v266
      %v299 = vcvt.s32.f32 %v267
      %v300 = vld [vmem:[%s155] sm:$0xf]
      %v301 = vstv 128
      %v302 = vadd.s32 %v163, %v301
      %v303 = vadd.s32 %v164, %v301
      %v304 = vadd.s32 %v165, %v301
      %v305 = vadd.s32 %v166, %v301
      %v306 = vadd.s32 %v167, %v301
      %v307 = vadd.s32 %v168, %v301
      %v308 = vadd.s32 %v169, %v301
      %v309 = vadd.s32 %v170, %v301
      %v310 = vadd.s32 %v171, %v301
      %v311 = vadd.s32 %v172, %v301
      %v312 = vadd.s32 %v173, %v301
      %v313 = vadd.s32 %v174, %v301
      %v314 = vadd.s32 %v175, %v301
      %v315 = vadd.s32 %v176, %v301
      %v316 = vadd.s32 %v177, %v301
      %v317 = vadd.s32 %v178, %v301
      %vm318 = vcmp.eq.s32.totalorder %v199, %v302
      %vm319 = vcmp.eq.s32.totalorder %v203, %v302
      %vm320 = vcmp.eq.s32.totalorder %v199, %v303
      %vm321 = vcmp.eq.s32.totalorder %v203, %v303
      %vm322 = vcmp.eq.s32.totalorder %v199, %v304
      %vm323 = vcmp.eq.s32.totalorder %v203, %v304
      %vm324 = vcmp.eq.s32.totalorder %v199, %v305
      %vm325 = vcmp.eq.s32.totalorder %v203, %v305
      %vm326 = vcmp.eq.s32.totalorder %v199, %v306
      %vm327 = vcmp.eq.s32.totalorder %v203, %v306
      %vm328 = vcmp.eq.s32.totalorder %v199, %v307
      %vm329 = vcmp.eq.s32.totalorder %v203, %v307
      %vm330 = vcmp.eq.s32.totalorder %v199, %v308
      %vm331 = vcmp.eq.s32.totalorder %v203, %v308
      %vm332 = vcmp.eq.s32.totalorder %v199, %v309
      %vm333 = vcmp.eq.s32.totalorder %v203, %v309
      %vm334 = vcmp.eq.s32.totalorder %v199, %v310
      %vm335 = vcmp.eq.s32.totalorder %v203, %v310
      %vm336 = vcmp.eq.s32.totalorder %v199, %v311
      %vm337 = vcmp.eq.s32.totalorder %v203, %v311
      %vm338 = vcmp.eq.s32.totalorder %v199, %v312
      %vm339 = vcmp.eq.s32.totalorder %v203, %v312
      %vm340 = vcmp.eq.s32.totalorder %v199, %v313
      %vm341 = vcmp.eq.s32.totalorder %v203, %v313
      %vm342 = vcmp.eq.s32.totalorder %v199, %v314
      %vm343 = vcmp.eq.s32.totalorder %v203, %v314
      %vm344 = vcmp.eq.s32.totalorder %v199, %v315
      %vm345 = vcmp.eq.s32.totalorder %v203, %v315
      %vm346 = vcmp.eq.s32.totalorder %v199, %v316
      %vm347 = vcmp.eq.s32.totalorder %v203, %v316
      %vm348 = vcmp.eq.s32.totalorder %v199, %v317
      %vm349 = vcmp.eq.s32.totalorder %v203, %v317
      %v350 = vsel %vm318, 1, 0
      %v351 = vsel %vm319, 1, 0
      %v352 = vsel %vm320, 1, 0
      %v353 = vsel %vm321, 1, 0
      %v354 = vsel %vm322, 1, 0
      %v355 = vsel %vm323, 1, 0
      %v356 = vsel %vm324, 1, 0
      %v357 = vsel %vm325, 1, 0
      %v358 = vsel %vm326, 1, 0
      %v359 = vsel %vm327, 1, 0
      %v360 = vsel %vm328, 1, 0
      %v361 = vsel %vm329, 1, 0
      %v362 = vsel %vm330, 1, 0
      %v363 = vsel %vm331, 1, 0
      %v364 = vsel %vm332, 1, 0
      %v365 = vsel %vm333, 1, 0
      %v366 = vsel %vm334, 1, 0
      %v367 = vsel %vm335, 1, 0
      %v368 = vsel %vm336, 1, 0
      %v369 = vsel %vm337, 1, 0
      %v370 = vsel %vm338, 1, 0
      %v371 = vsel %vm339, 1, 0
      %v372 = vsel %vm340, 1, 0
      %v373 = vsel %vm341, 1, 0
      %v374 = vsel %vm342, 1, 0
      %v375 = vsel %vm343, 1, 0
      %v376 = vsel %vm344, 1, 0
      %v377 = vsel %vm345, 1, 0
      %v378 = vsel %vm346, 1, 0
      %v379 = vsel %vm347, 1, 0
      %v380 = vsel %vm348, 1, 0
      %v381 = vsel %vm349, 1, 0
      %v382 = vcvt.s32.f32 %v350
      %v383 = vcvt.s32.f32 %v351
      %v384 = vcvt.s32.f32 %v352
      %v385 = vcvt.s32.f32 %v353
      %v386 = vcvt.s32.f32 %v354
      %v387 = vcvt.s32.f32 %v355
      %v388 = vcvt.s32.f32 %v356
      %v389 = vcvt.s32.f32 %v357
      %v390 = vcvt.s32.f32 %v358
      %v391 = vcvt.s32.f32 %v359
      %v392 = vcvt.s32.f32 %v360
      %v393 = vcvt.s32.f32 %v361
      %v394 = vcvt.s32.f32 %v362
      %v395 = vcvt.s32.f32 %v363
      %v396 = vcvt.s32.f32 %v364
      %v397 = vcvt.s32.f32 %v365
      %v398 = vcvt.s32.f32 %v366
      %v399 = vcvt.s32.f32 %v367
      %v400 = vcvt.s32.f32 %v368
      %v401 = vcvt.s32.f32 %v369
      %v402 = vcvt.s32.f32 %v370
      %v403 = vcvt.s32.f32 %v371
      %v404 = vcvt.s32.f32 %v372
      %v405 = vcvt.s32.f32 %v373
      %v406 = vcvt.s32.f32 %v374
      %v407 = vcvt.s32.f32 %v375
      %v408 = vcvt.s32.f32 %v376
      %v409 = vcvt.s32.f32 %v377
      %v410 = vcvt.s32.f32 %v378
      %v411 = vcvt.s32.f32 %v379
      %v412 = vcvt.s32.f32 %v380
      %v413 = vcvt.s32.f32 %v381
      %s414 = scalar_lea.vmem %s155, 4
      %v415 = vld [vmem:[%s414] sm:$0xf]
      %416 = vmatprep.subr.mxu0 %v383
      %417 = vmatpush1.msra.mxu0 %v382
      %418 = vmatprep.subr.mxu0 %v385
      %419 = vmatpush1.msra.mxu0 %v384
      %420 = vmatprep.subr.mxu0 %v387
      %421 = vmatpush1.msra.mxu0 %v386
      %422 = vmatprep.subr.mxu0 %v389
      %423 = vmatpush1.msra.mxu0 %v388
      %424 = vmatprep.subr.mxu0 %v391
      %425 = vmatpush1.msra.mxu0 %v390
      %426 = vmatprep.subr.mxu0 %v393
      %427 = vmatpush1.msra.mxu0 %v392
      %428 = vmatprep.subr.mxu0 %v395
      %429 = vmatpush1.msra.mxu0 %v394
      %430 = vmatprep.subr.mxu0 %v397
      %431 = vmatpush1.msra.mxu0 %v396
      %432 = vmatprep.subr.mxu0 %v399
      %433 = vmatpush1.msra.mxu0 %v398
      %434 = vmatprep.subr.mxu0 %v401
      %435 = vmatpush1.msra.mxu0 %v400
      %436 = vmatprep.subr.mxu0 %v403
      %437 = vmatpush1.msra.mxu0 %v402
      %438 = vmatprep.subr.mxu0 %v405
      %439 = vmatpush1.msra.mxu0 %v404
      %440 = vmatprep.subr.mxu0 %v407
      %441 = vmatpush1.msra.mxu0 %v406
      %442 = vmatprep.subr.mxu0 %v409
      %443 = vmatpush1.msra.mxu0 %v408
      %444 = vmatprep.subr.mxu0 %v411
      %445 = vmatpush1.msra.mxu0 %v410
      %446 = vmatprep.subr.mxu0 %v413
      %447 = vmatpush1.msra.mxu0 %v412
      %448 = vmatprep.subr.mxu0 0.0
      %449 = vmatpush1.msra.mxu0 0.0
      %450 = vmatprep.subr.mxu0 0.0
      %451 = vmatpush1.msra.mxu0 0.0
      %452 = vmatprep.subr.mxu0 0.0
      %453 = vmatpush1.msra.mxu0 0.0
      %454 = vmatprep.subr.mxu0 0.0
      %455 = vmatpush1.msra.mxu0 0.0
      %456 = vmatprep.subr.mxu0 0.0
      %457 = vmatpush1.msra.mxu0 0.0
      %458 = vmatprep.subr.mxu0 0.0
      %459 = vmatpush1.msra.mxu0 0.0
      %460 = vmatprep.subr.mxu0 0.0
      %461 = vmatpush1.msra.mxu0 0.0
      %462 = vmatprep.subr.mxu0 0.0
      %463 = vmatpush1.msra.mxu0 0.0
      %464 = vmatprep.subr.mxu0 0.0
      %465 = vmatpush1.msra.mxu0 0.0
      %466 = vmatprep.subr.mxu0 0.0
      %467 = vmatpush1.msra.mxu0 0.0
      %468 = vmatprep.subr.mxu0 0.0
      %469 = vmatpush1.msra.mxu0 0.0
      %470 = vmatprep.subr.mxu0 0.0
      %471 = vmatpush1.msra.mxu0 0.0
      %472 = vmatprep.subr.mxu0 0.0
      %473 = vmatpush1.msra.mxu0 0.0
      %474 = vmatprep.subr.mxu0 0.0
      %475 = vmatpush1.msra.mxu0 0.0
      %476 = vmatprep.subr.mxu0 0.0
      %477 = vmatpush1.msra.mxu0 0.0
      %478 = vmatprep.subr.mxu0 0.0
      %479 = vmatpush1.msra.mxu0 0.0
      %480 = vmatprep.mubr.f32.mxu0 0.0
      %481 = vmatmul.mubr.f32.gmra.mrb[0].mxu0 %v415
      %v482 = vpop.f32.mrb[0].mxu0
      %v483 = vadd.f32 0.0, %v482
      %v484 = vpop.f32.mrb[0].mxu0
      %v485 = vadd.f32 0.0, %v484
      %486 = vdwg.mxu0
      %487 = vmatprep.subr.mxu0 %v269
      %488 = vmatpush1.msra.mxu0 %v268
      %489 = vmatprep.subr.mxu0 %v271
      %490 = vmatpush1.msra.mxu0 %v270
      %491 = vmatprep.subr.mxu0 %v273
      %492 = vmatpush1.msra.mxu0 %v272
      %493 = vmatprep.subr.mxu0 %v275
      %494 = vmatpush1.msra.mxu0 %v274
      %495 = vmatprep.subr.mxu0 %v277
      %496 = vmatpush1.msra.mxu0 %v276
      %497 = vmatprep.subr.mxu0 %v279
      %498 = vmatpush1.msra.mxu0 %v278
      %499 = vmatprep.subr.mxu0 %v281
      %500 = vmatpush1.msra.mxu0 %v280
      %501 = vmatprep.subr.mxu0 %v283
      %502 = vmatpush1.msra.mxu0 %v282
      %503 = vmatprep.subr.mxu0 %v285
      %504 = vmatpush1.msra.mxu0 %v284
      %505 = vmatprep.subr.mxu0 %v287
      %506 = vmatpush1.msra.mxu0 %v286
      %507 = vmatprep.subr.mxu0 %v289
      %508 = vmatpush1.msra.mxu0 %v288
      %509 = vmatprep.subr.mxu0 %v291
      %510 = vmatpush1.msra.mxu0 %v290
      %511 = vmatprep.subr.mxu0 %v293
      %512 = vmatpush1.msra.mxu0 %v292
      %513 = vmatprep.subr.mxu0 %v295
      %514 = vmatpush1.msra.mxu0 %v294
      %515 = vmatprep.subr.mxu0 %v297
      %516 = vmatpush1.msra.mxu0 %v296
      %517 = vmatprep.subr.mxu0 %v299
      %518 = vmatpush1.msra.mxu0 %v298
      %519 = vmatprep.subr.mxu0 0.0
      %520 = vmatpush1.msra.mxu0 0.0
      %521 = vmatprep.subr.mxu0 0.0
      %522 = vmatpush1.msra.mxu0 0.0
      %523 = vmatprep.subr.mxu0 0.0
      %524 = vmatpush1.msra.mxu0 0.0
      %525 = vmatprep.subr.mxu0 0.0
      %526 = vmatpush1.msra.mxu0 0.0
      %527 = vmatprep.subr.mxu0 0.0
      %528 = vmatpush1.msra.mxu0 0.0
      %529 = vmatprep.subr.mxu0 0.0
      %530 = vmatpush1.msra.mxu0 0.0
      %531 = vmatprep.subr.mxu0 0.0
      %532 = vmatpush1.msra.mxu0 0.0
      %533 = vmatprep.subr.mxu0 0.0
      %534 = vmatpush1.msra.mxu0 0.0
      %535 = vmatprep.subr.mxu0 0.0
      %536 = vmatpush1.msra.mxu0 0.0
      %537 = vmatprep.subr.mxu0 0.0
      %538 = vmatpush1.msra.mxu0 0.0
      %539 = vmatprep.subr.mxu0 0.0
      %540 = vmatpush1.msra.mxu0 0.0
      %541 = vmatprep.subr.mxu0 0.0
      %542 = vmatpush1.msra.mxu0 0.0
      %543 = vmatprep.subr.mxu0 0.0
      %544 = vmatpush1.msra.mxu0 0.0
      %545 = vmatprep.subr.mxu0 0.0
      %546 = vmatpush1.msra.mxu0 0.0
      %547 = vmatprep.subr.mxu0 0.0
      %548 = vmatpush1.msra.mxu0 0.0
      %549 = vmatprep.subr.mxu0 0.0
      %550 = vmatpush1.msra.mxu0 0.0
      %551 = vmatprep.mubr.f32.mxu0 0.0
      %552 = vmatmul.mubr.f32.gmra.mrb[0].mxu0 %v300
      %v553 = vpop.f32.mrb[0].mxu0
      %v554 = vadd.f32 %v483, %v553
      %v555 = vpop.f32.mrb[0].mxu0
      %v556 = vadd.f32 %v485, %v555
      %557 = vdwg.mxu0
      %v560 = vcombine.low %v554, %v556
      %562 = vst [vmem:[%s160] sm:$0xff] %v560
      %p563 = scmp.lt.s32.totalorder %s13, 1
      %s564 = scalar_select %p563, %s13, 1
      %s565 = smul.addr %s564, 2
      %s566 = smul.addr %s565, 4
      %s567 = scalar_lea.vmem %s2, %s566
      // Predicated region
      $region29: #{_forward_core.1} parent=27 // pred_check
        %p568 = pneg %p83
      $region30: #{_forward_core.1} parent=27 // pred_check_branch
        %570 = sbr.rel (%p568) target = $region32
      $region31: #{_forward_core.1} parent=27 // pred_region
        _
      $region32: #{_forward_core.1} parent=27 // pred_fallthru
        _
    $region28: #{_forward_core.1} parent=5 // pred_fallthru
      _
    %p571 = scmp.le.s32.totalorder 2, %s8
    // Predicated region
    $region33: #{_forward_core.1} parent=5 // pred_check
      %p572 = pneg %p571
    $region34: #{_forward_core.1} parent=5 // pred_check_branch
      %574 = sbr.rel (%p572) target = $region36
    $region35: #{_forward_core.1} parent=5 // pred_region
      %s575 = ssub.s32 %s8, 2
      // Predicated region
      $region37: #{_forward_core.1} parent=35 // pred_check
        %p576 = pneg %p89
      $region38: #{_forward_core.1} parent=35 // pred_check_branch
        %578 = sbr.rel (%p576) target = $region40
      $region39: #{_forward_core.1} parent=35 // pred_region
        %p579 = scmp.lt.s32.totalorder %s14, 1
        %s580 = scalar_select %p579, %s14, 1
        %s581 = smul.addr %s580, 2
        %s582 = smul.addr %s581, 4
        %s583 = scalar_lea.vmem %s2, %s582
      $region40: #{_forward_core.1} parent=35 // pred_fallthru
        _
    $region36: #{_forward_core.1} parent=5 // pred_fallthru
      _
  $region6: #{_forward_core.1} parent=0 // loop_footer
    %s12 = sadd.s32 1, %s8
  $region7: #{_forward_core.1} parent=0 // loop_footer_branch
    %7 = sbr.rel target = $region3
  $region8: #{_forward_core.1} parent=0 // loop_exit
    _

</llo_original>
